<compile_context>
chip_gen: v7x
topology: tpu7x:2x2x1
jax: 0.10.0
libtpu: 0.0.40
codegen_flags: <defaults>
</compile_context>

<pallas_src>
import functools

import jax
import jax.numpy as jnp
from jax.experimental import pallas as pl
from jax.experimental.pallas import tpu as pltpu


def _mlp_kernel(x_ref, w1_ref, b1_ref, w2_ref, b2_ref, w3_ref, b3_ref, o_ref):
    # Batch-on-lanes layout: x_ref (2, TB), intermediates (10, TB), out (1, TB).
    x = x_ref[...]

    # layer 1: (10,2) @ (2,TB) + (10,1) -> ReLU
    h1 = jnp.dot(w1_ref[...], x, preferred_element_type=jnp.float32) + b1_ref[...]
    h1 = jnp.maximum(h1, 0.0)

    # layer 2: (10,10) @ (10,TB) + (10,1) -> ReLU
    h2 = jnp.dot(w2_ref[...], h1, preferred_element_type=jnp.float32) + b2_ref[...]
    h2 = jnp.maximum(h2, 0.0)

    # layer 3: (1,10) @ (10,TB) + (1,1) -> sigmoid
    z = jnp.dot(w3_ref[...], h2, preferred_element_type=jnp.float32) + b3_ref[...]
    # exp and approximate reciprocal both land on the EUP slot (free here).
    o_ref[...] = pl.reciprocal(1.0 + jnp.exp(-z), approx=True).astype(o_ref.dtype)


@functools.partial(jax.jit, static_argnames=("block_b",))
def mlp_forward(x, w1, b1, w2, b2, w3, b3, *, block_b=1024):
    """Fused MLP forward.

    x:  (B, 2) float32
    w1: (10, 2), b1: (10, 1)   -- PyTorch-native (out_features, in_features)
    w2: (10, 10), b2: (10, 1)
    w3: (1, 10),  b3: (1, 1)
    returns (B, 1) float32
    """
    B = x.shape[0]

    # Batch onto the lane axis; pad batch to a lane-aligned tile multiple.
    tb = min(block_b, pl.cdiv(B, 128) * 128)          # lane-aligned batch tile
    Bp = pl.cdiv(B, tb) * tb
    xt = x.T.astype(jnp.float32)                      # (2, B) — fused w/ pad under jit
    if Bp != B:
        xt = jnp.pad(xt, ((0, 0), (0, Bp - B)))
    grid = (Bp // tb,)

    # Weights / biases: constant index_map -> fetched once, resident in VMEM.
    const = lambda shape: pl.BlockSpec(shape, lambda i: (0, 0))

    out = pl.pallas_call(
        _mlp_kernel,
        out_shape=jax.ShapeDtypeStruct((1, Bp), jnp.float32),
        grid=grid,
        in_specs=[
            pl.BlockSpec((2, tb), lambda i: (0, i)),   # x: streamed per tile
            const(w1.shape), const(b1.shape),
            const(w2.shape), const(b2.shape),
            const(w3.shape), const(b3.shape),
        ],
        out_specs=pl.BlockSpec((1, tb), lambda i: (0, i)),   # lane-dense stores
        compiler_params=pltpu.CompilerParams(
            dimension_semantics=("parallel",)),        # shard batch across TCs
    )(xt, w1, b1, w2, b2, w3, b3)

    # (1, Bp) -> (Bp, 1) is a pure reshape (no data movement); then trim pad.
    return out.reshape(Bp, 1)[:B]


def init_params(key):
    """PyTorch nn.Linear default init (U[-1/sqrt(fan_in), 1/sqrt(fan_in)]).

    Weights stored PyTorch-native as (out_features, in_features); biases as
    (out_features, 1) columns so they broadcast over the lane (batch) axis.
    """
    def linear(k, fan_in, fan_out):
        kw, kb = jax.random.split(k)
        bound = 1.0 / jnp.sqrt(fan_in)
        w = jax.random.uniform(kw, (fan_out, fan_in), jnp.float32, -bound, bound)
        b = jax.random.uniform(kb, (fan_out, 1), jnp.float32, -bound, bound)
        return w, b

    k1, k2, k3 = jax.random.split(key, 3)
    w1, b1 = linear(k1, 2, 10)
    w2, b2 = linear(k2, 10, 10)
    w3, b3 = linear(k3, 10, 1)
    return w1, b1, w2, b2, w3, b3


if __name__ == "__main__":
    key = jax.random.PRNGKey(0)
    k_params, k_x = jax.random.split(key)

    w1, b1, w2, b2, w3, b3 = init_params(k_params)

    batch = 8
    x = jax.random.normal(k_x, (batch, 2), dtype=jnp.float32)

    out = mlp_forward(x, w1, b1, w2, b2, w3, b3)
    out = jax.block_until_ready(out)

    # sanity check vs plain-JAX reference (PyTorch layout: y = x @ W.T + b)
    h1 = jnp.maximum(x @ w1.T + b1.T, 0.0)
    h2 = jnp.maximum(h1 @ w2.T + b2.T, 0.0)
    ref = jax.nn.sigmoid(h2 @ w3.T + b3.T)
    assert out.shape == (batch, 1), out.shape
    # approx reciprocal on the EUP has ~2^-12 relative error; sigmoid <= 1
    assert jnp.allclose(out, ref, atol=2e-3), "mismatch vs reference"

    print("KERNEL_OK")
</pallas_src>

<mosaic_0001>
module attributes {stable_mosaic.version = 11 : i64} {
  func.func @_mlp_kernel(%arg0: i32, %arg1: memref<2x128xf32, #tpu.memory_space<vmem>>, %arg2: memref<10x2xf32, #tpu.memory_space<vmem>>, %arg3: memref<10x1xf32, #tpu.memory_space<vmem>>, %arg4: memref<10x10xf32, #tpu.memory_space<vmem>>, %arg5: memref<10x1xf32, #tpu.memory_space<vmem>>, %arg6: memref<1x10xf32, #tpu.memory_space<vmem>>, %arg7: memref<1x1xf32, #tpu.memory_space<vmem>>, %arg8: memref<1x128xf32, #tpu.memory_space<vmem>>) attributes {dimension_semantics = [#tpu.dimension_semantics<parallel>], iteration_bounds = array<i64: 1>, scalar_prefetch = 0 : i64, scratch_operands = 0 : i64, tpu.core_type = #tpu.core_type<tc>, window_params = [{transform_indices = @transform_0, window_bounds = array<i64: 2, 128>}, {pipeline_mode = #tpu.pipeline_mode<synchronous>, transform_indices = @transform_1, window_bounds = array<i64: 10, 2>}, {pipeline_mode = #tpu.pipeline_mode<synchronous>, transform_indices = @transform_2, window_bounds = array<i64: 10, 1>}, {pipeline_mode = #tpu.pipeline_mode<synchronous>, transform_indices = @transform_3, window_bounds = array<i64: 10, 10>}, {pipeline_mode = #tpu.pipeline_mode<synchronous>, transform_indices = @transform_4, window_bounds = array<i64: 10, 1>}, {pipeline_mode = #tpu.pipeline_mode<synchronous>, transform_indices = @transform_5, window_bounds = array<i64: 1, 10>}, {pipeline_mode = #tpu.pipeline_mode<synchronous>, transform_indices = @transform_6, window_bounds = array<i64: 1, 1>}, {transform_indices = @transform_7, window_bounds = array<i64: 1, 128>}]} {
    %c0 = arith.constant 0 : index
    %c0_0 = arith.constant 0 : index
    %0 = vector.load %arg1[%c0, %c0_0] : memref<2x128xf32, #tpu.memory_space<vmem>>, vector<2x128xf32>
    %c0_1 = arith.constant 0 : index
    %c0_2 = arith.constant 0 : index
    %1 = vector.load %arg2[%c0_1, %c0_2] : memref<10x2xf32, #tpu.memory_space<vmem>>, vector<10x2xf32>
    %cst = arith.constant dense<0.000000e+00> : vector<10x128xf32>
    %2 = tpu.matmul %1, %0, %cst {dimension_numbers = #tpu.dot_dimension_numbers<[1], [0], [0], [1], [0, 0, 1, 1], [], []>} : vector<10x2xf32>, vector<2x128xf32>, vector<10x128xf32> -> vector<10x128xf32>
    %c0_3 = arith.constant 0 : index
    %c0_4 = arith.constant 0 : index
    %3 = vector.load %arg3[%c0_3, %c0_4] : memref<10x1xf32, #tpu.memory_space<vmem>>, vector<10x1xf32>
    %4 = vector.broadcast %3 : vector<10x1xf32> to vector<10x128xf32>
    %5 = arith.addf %2, %4 : vector<10x128xf32>
    %cst_5 = arith.constant 0.000000e+00 : f32
    %6 = vector.broadcast %cst_5 : f32 to vector<10x128xf32>
    %7 = arith.maximumf %5, %6 : vector<10x128xf32>
    %c0_6 = arith.constant 0 : index
    %c0_7 = arith.constant 0 : index
    %8 = vector.load %arg4[%c0_6, %c0_7] : memref<10x10xf32, #tpu.memory_space<vmem>>, vector<10x10xf32>
    %cst_8 = arith.constant dense<0.000000e+00> : vector<10x128xf32>
    %9 = tpu.matmul %8, %7, %cst_8 {dimension_numbers = #tpu.dot_dimension_numbers<[1], [0], [0], [1], [0, 0, 1, 1], [], []>} : vector<10x10xf32>, vector<10x128xf32>, vector<10x128xf32> -> vector<10x128xf32>
    %c0_9 = arith.constant 0 : index
    %c0_10 = arith.constant 0 : index
    %10 = vector.load %arg5[%c0_9, %c0_10] : memref<10x1xf32, #tpu.memory_space<vmem>>, vector<10x1xf32>
    %11 = vector.broadcast %10 : vector<10x1xf32> to vector<10x128xf32>
    %12 = arith.addf %9, %11 : vector<10x128xf32>
    %cst_11 = arith.constant 0.000000e+00 : f32
    %13 = vector.broadcast %cst_11 : f32 to vector<10x128xf32>
    %14 = arith.maximumf %12, %13 : vector<10x128xf32>
    %c0_12 = arith.constant 0 : index
    %c0_13 = arith.constant 0 : index
    %15 = vector.load %arg6[%c0_12, %c0_13] : memref<1x10xf32, #tpu.memory_space<vmem>>, vector<1x10xf32>
    %cst_14 = arith.constant dense<0.000000e+00> : vector<1x128xf32>
    %16 = tpu.matmul %15, %14, %cst_14 {dimension_numbers = #tpu.dot_dimension_numbers<[1], [0], [0], [1], [0, 0, 1, 1], [], []>} : vector<1x10xf32>, vector<10x128xf32>, vector<1x128xf32> -> vector<1x128xf32>
    %c0_15 = arith.constant 0 : index
    %c0_16 = arith.constant 0 : index
    %17 = vector.load %arg7[%c0_15, %c0_16] : memref<1x1xf32, #tpu.memory_space<vmem>>, vector<1x1xf32>
    %18 = vector.broadcast %17 : vector<1x1xf32> to vector<1x128xf32>
    %19 = arith.addf %16, %18 : vector<1x128xf32>
    %cst_17 = arith.constant 0.000000e+00 : f32
    %20 = vector.broadcast %cst_17 : f32 to vector<1x128xf32>
    %21 = arith.subf %20, %19 : vector<1x128xf32>
    %22 = math.exp %21 : vector<1x128xf32>
    %cst_18 = arith.constant 1.000000e+00 : f32
    %23 = vector.broadcast %cst_18 : f32 to vector<1x128xf32>
    %24 = arith.addf %23, %22 : vector<1x128xf32>
    %25 = tpu.reciprocal %24 {approx = true} : vector<1x128xf32> -> vector<1x128xf32>
    %c0_19 = arith.constant 0 : index
    %c0_20 = arith.constant 0 : index
    %26 = vector.load %arg8[%c0_19, %c0_20] : memref<1x128xf32, #tpu.memory_space<vmem>>, vector<1x128xf32>
    tpu.vector_store %arg8[%c0_19, %c0_20], %25 {strides = array<i32>} : memref<1x128xf32, #tpu.memory_space<vmem>>, vector<1x128xf32>,
    return
  }
  func.func @transform_0(%arg0: i32) -> (i32, i32) {
    %c0_i32 = arith.constant 0 : i32
    %c0_i32_0 = arith.constant 0 : i32
    return %c0_i32, %arg0 : i32, i32
  }
  func.func @transform_1(%arg0: i32) -> (i32, i32) {
    %c0_i32 = arith.constant 0 : i32
    %c0_i32_0 = arith.constant 0 : i32
    %c0_i32_1 = arith.constant 0 : i32
    return %c0_i32, %c0_i32_0 : i32, i32
  }
  func.func @transform_2(%arg0: i32) -> (i32, i32) {
    %c0_i32 = arith.constant 0 : i32
    %c0_i32_0 = arith.constant 0 : i32
    %c0_i32_1 = arith.constant 0 : i32
    return %c0_i32, %c0_i32_0 : i32, i32
  }
  func.func @transform_3(%arg0: i32) -> (i32, i32) {
    %c0_i32 = arith.constant 0 : i32
    %c0_i32_0 = arith.constant 0 : i32
    %c0_i32_1 = arith.constant 0 : i32
    return %c0_i32, %c0_i32_0 : i32, i32
  }
  func.func @transform_4(%arg0: i32) -> (i32, i32) {
    %c0_i32 = arith.constant 0 : i32
    %c0_i32_0 = arith.constant 0 : i32
    %c0_i32_1 = arith.constant 0 : i32
    return %c0_i32, %c0_i32_0 : i32, i32
  }
  func.func @transform_5(%arg0: i32) -> (i32, i32) {
    %c0_i32 = arith.constant 0 : i32
    %c0_i32_0 = arith.constant 0 : i32
    %c0_i32_1 = arith.constant 0 : i32
    return %c0_i32, %c0_i32_0 : i32, i32
  }
  func.func @transform_6(%arg0: i32) -> (i32, i32) {
    %c0_i32 = arith.constant 0 : i32
    %c0_i32_0 = arith.constant 0 : i32
    %c0_i32_1 = arith.constant 0 : i32
    return %c0_i32, %c0_i32_0 : i32, i32
  }
  func.func @transform_7(%arg0: i32) -> (i32, i32) {
    %c0_i32 = arith.constant 0 : i32
    %c0_i32_0 = arith.constant 0 : i32
    return %c0_i32, %arg0 : i32, i32
  }
}

</mosaic_0001>

<llo_original>
// kernel: mlp_forward.1
$region0: #{mlp_forward.1}
  #allocation0 [shape = 'u32[]', space=smem, size = 0x4, offset = 0x4, fixed_abs, tag = 'smem constant byte address 0x4 - core index']
  #allocation1 [shape = 'u32[144,128]{1,0:T(1,128)}', space=vmem, size = 0x12000, scoped, tag = 'internal scratch']
  #allocation2 [shape = 'f32[1,1]{1,0:T(1,128)S(1)}', space=vmem, size = 0x200, scoped, tag = 'scoped memory for mlp_forward.1']
  %s0 = inlined_call_operand.vmem [shape: f32[2,128], index: 0, kind: input, shape index: {}]
  %s1 = inlined_call_operand.vmem [shape: f32[10,2], index: 1, kind: input, shape index: {}]
  %s2 = inlined_call_operand.vmem [shape: f32[10,1], index: 2, kind: input, shape index: {}]
  %s3 = inlined_call_operand.vmem [shape: f32[10,10], index: 3, kind: input, shape index: {}]
  %s4 = inlined_call_operand.vmem [shape: f32[10,1], index: 4, kind: input, shape index: {}]
  %s5 = inlined_call_operand.vmem [shape: f32[1,10], index: 5, kind: input, shape index: {}]
  %s6 = inlined_call_operand.<no memory space> [shape: f32[1,1], index: 6, kind: input, shape index: {}]
  %s7 = inlined_call_operand.vmem [shape: f32[1,128], index: 7, kind: output, shape index: {}]
  %s8 = sld [smem:[#allocation0]]
  $region38: #{mlp_forward.1} parent=0
    _
  %s10 = ssub.s32 1, %s8
  %s11 = scalar_select 0, %s10, %s8
  %v12 = vstv %s6
  %13 = vst [vmem:[#allocation2] sm:$0x1] %v12
  // Predicated region
  $region2: #{mlp_forward.1} parent=0 // pred_check
    _
  $region3: #{mlp_forward.1} parent=0 // pred_check_branch
    %15 = sbr.rel (0) target = $region5
  $region4: #{mlp_forward.1} parent=0 // pred_region
    _
  $region5: #{mlp_forward.1} parent=0 // pred_fallthru
    _
  // Predicated region
  $region6: #{mlp_forward.1} parent=0 // pred_check
    _
  $region7: #{mlp_forward.1} parent=0 // pred_check_branch
    %17 = sbr.rel (0) target = $region9
  $region8: #{mlp_forward.1} parent=0 // pred_region
    _
  $region9: #{mlp_forward.1} parent=0 // pred_fallthru
    _
  // Predicated region
  $region10: #{mlp_forward.1} parent=0 // pred_check
    _
  $region11: #{mlp_forward.1} parent=0 // pred_check_branch
    %19 = sbr.rel (0) target = $region13
  $region12: #{mlp_forward.1} parent=0 // pred_region
    _
  $region13: #{mlp_forward.1} parent=0 // pred_fallthru
    _
  // Predicated region
  $region14: #{mlp_forward.1} parent=0 // pred_check
    _
  $region15: #{mlp_forward.1} parent=0 // pred_check_branch
    %21 = sbr.rel (0) target = $region17
  $region16: #{mlp_forward.1} parent=0 // pred_region
    _
  $region17: #{mlp_forward.1} parent=0 // pred_fallthru
    _
  // Predicated region
  $region18: #{mlp_forward.1} parent=0 // pred_check
    _
  $region19: #{mlp_forward.1} parent=0 // pred_check_branch
    %23 = sbr.rel (0) target = $region21
  $region20: #{mlp_forward.1} parent=0 // pred_region
    _
  $region21: #{mlp_forward.1} parent=0 // pred_fallthru
    _
  // Predicated region
  $region22: #{mlp_forward.1} parent=0 // pred_check
    _
  $region23: #{mlp_forward.1} parent=0 // pred_check_branch
    %25 = sbr.rel (0) target = $region25
  $region24: #{mlp_forward.1} parent=0 // pred_region
    _
  $region25: #{mlp_forward.1} parent=0 // pred_fallthru
    _
  // Predicated region
  $region26: #{mlp_forward.1} parent=0 // pred_check
    _
  $region27: #{mlp_forward.1} parent=0 // pred_check_branch
    %27 = sbr.rel (0) target = $region29
  $region28: #{mlp_forward.1} parent=0 // pred_region
    _
  $region29: #{mlp_forward.1} parent=0 // pred_fallthru
    _
  %v28 = vld [vmem:[%s0] sm:$0x3]
  %v29 = vld [vmem:[%s1] sm:$0xff]
  %v30 = vld [vmem:[%s1 + $0x8] sm:$0x3]
  %v31 = vld [vmem:[%s2] sm:$0xff]
  %v32 = vld [vmem:[%s2 + $0x8] sm:$0x3]
  %34 = vset.pattern.permute.xlu0 0
  %35 = vperm.xlu0 %34, %v31
  %v36 = vpop.permute.xlu0 %35
  %39 = vset.pattern.permute.xlu0 0
  %40 = vperm.xlu0 %39, %v32
  %v41 = vpop.permute.xlu0 %40
  %vm43 = vcmask 15360
  %v45 = vsel %vm43, %v29, 0
  %v48 = vsel %vm43, %v30, 0
  %vm50 = vcmask 1041408
  %v52 = vsel %vm50, %v28, 0
  %54 = vmatprep.subr.mxu0 0.0
  %55 = vmatpush1.msra.mxu0 %v52
  %56 = vmatprep.subr.mxu0 0.0
  %57 = vmatpush1.msra.mxu0 0.0
  %58 = vmatprep.subr.mxu0 0.0
  %59 = vmatpush1.msra.mxu0 0.0
  %60 = vmatprep.subr.mxu0 0.0
  %61 = vmatpush1.msra.mxu0 0.0
  %62 = vmatprep.subr.mxu0 0.0
  %63 = vmatpush1.msra.mxu0 0.0
  %64 = vmatprep.subr.mxu0 0.0
  %65 = vmatpush1.msra.mxu0 0.0
  %66 = vmatprep.subr.mxu0 0.0
  %67 = vmatpush1.msra.mxu0 0.0
  %68 = vmatprep.subr.mxu0 0.0
  %69 = vmatpush1.msra.mxu0 0.0
  %70 = vmatprep.subr.mxu0 0.0
  %71 = vmatpush1.msra.mxu0 0.0
  %72 = vmatprep.subr.mxu0 0.0
  %73 = vmatpush1.msra.mxu0 0.0
  %74 = vmatprep.subr.mxu0 0.0
  %75 = vmatpush1.msra.mxu0 0.0
  %76 = vmatprep.subr.mxu0 0.0
  %77 = vmatpush1.msra.mxu0 0.0
  %78 = vmatprep.subr.mxu0 0.0
  %79 = vmatpush1.msra.mxu0 0.0
  %80 = vmatprep.subr.mxu0 0.0
  %81 = vmatpush1.msra.mxu0 0.0
  %82 = vmatprep.subr.mxu0 0.0
  %83 = vmatpush1.msra.mxu0 0.0
  %84 = vmatprep.subr.mxu0 0.0
  %85 = vmatpush1.msra.mxu0 0.0
  %86 = vmatprep.subr.mxu0 0.0
  %87 = vmatpush1.msra.mxu0 0.0
  %88 = vmatprep.subr.mxu0 0.0
  %89 = vmatpush1.msra.mxu0 0.0
  %90 = vmatprep.subr.mxu0 0.0
  %91 = vmatpush1.msra.mxu0 0.0
  %92 = vmatprep.subr.mxu0 0.0
  %93 = vmatpush1.msra.mxu0 0.0
  %94 = vmatprep.subr.mxu0 0.0
  %95 = vmatpush1.msra.mxu0 0.0
  %96 = vmatprep.subr.mxu0 0.0
  %97 = vmatpush1.msra.mxu0 0.0
  %98 = vmatprep.subr.mxu0 0.0
  %99 = vmatpush1.msra.mxu0 0.0
  %100 = vmatprep.subr.mxu0 0.0
  %101 = vmatpush1.msra.mxu0 0.0
  %102 = vmatprep.subr.mxu0 0.0
  %103 = vmatpush1.msra.mxu0 0.0
  %104 = vmatprep.subr.mxu0 0.0
  %105 = vmatpush1.msra.mxu0 0.0
  %106 = vmatprep.subr.mxu0 0.0
  %107 = vmatpush1.msra.mxu0 0.0
  %108 = vmatprep.subr.mxu0 0.0
  %109 = vmatpush1.msra.mxu0 0.0
  %110 = vmatprep.subr.mxu0 0.0
  %111 = vmatpush1.msra.mxu0 0.0
  %112 = vmatprep.subr.mxu0 0.0
  %113 = vmatpush1.msra.mxu0 0.0
  %114 = vmatprep.subr.mxu0 0.0
  %115 = vmatpush1.msra.mxu0 0.0
  %116 = vmatprep.subr.mxu0 0.0
  %117 = vmatpush1.msra.mxu0 0.0
  %118 = vmatprep.mubr.f32.mxu0 0.0
  %119 = vmatmul.mubr.f32.gmra.mrb[0].mxu0 %v45
  %v120 = vpop.f32.mrb[0].mxu0
  %v121 = vadd.f32 %v36, %v120
  %v122 = vpop.f32.mrb[0].mxu0
  %123 = vmatprep.mubr.f32.mxu0 0.0
  %124 = vmatmul.mubr.f32.gmra.mrb[0].mxu0 %v48
  %v125 = vpop.f32.mrb[0].mxu0
  %v126 = vadd.f32 %v41, %v125
  %v127 = vpop.f32.mrb[0].mxu0
  %128 = vdwg.mxu0
  %v129 = vmax.f32 %v121, 0.0
  %v130 = vmax.f32 %v126, 0.0
  %v131 = vld [vmem:[%s3] sm:$0xff]
  %v132 = vld [vmem:[%s3 + $0x8] sm:$0x3]
  %v133 = vld [vmem:[%s4] sm:$0xff]
  %v134 = vld [vmem:[%s4 + $0x8] sm:$0x3]
  %136 = vset.pattern.permute.xlu0 0
  %137 = vperm.xlu0 %136, %v133
  %v138 = vpop.permute.xlu0 %137
  %141 = vset.pattern.permute.xlu0 0
  %142 = vperm.xlu0 %141, %v134
  %v143 = vpop.permute.xlu0 %142
  %vm145 = vcmask 80896
  %v147 = vsel %vm145, %v131, 0
  %v150 = vsel %vm145, %v132, 0
  %v153 = vsel %vm50, %v130, 0
  %155 = vmatprep.subr.mxu0 0.0
  %156 = vmatpush1.msra.mxu0 %v129
  %157 = vmatprep.subr.mxu0 0.0
  %158 = vmatpush1.msra.mxu0 %v153
  %159 = vmatprep.subr.mxu0 0.0
  %160 = vmatpush1.msra.mxu0 0.0
  %161 = vmatprep.subr.mxu0 0.0
  %162 = vmatpush1.msra.mxu0 0.0
  %163 = vmatprep.subr.mxu0 0.0
  %164 = vmatpush1.msra.mxu0 0.0
  %165 = vmatprep.subr.mxu0 0.0
  %166 = vmatpush1.msra.mxu0 0.0
  %167 = vmatprep.subr.mxu0 0.0
  %168 = vmatpush1.msra.mxu0 0.0
  %169 = vmatprep.subr.mxu0 0.0
  %170 = vmatpush1.msra.mxu0 0.0
  %171 = vmatprep.subr.mxu0 0.0
  %172 = vmatpush1.msra.mxu0 0.0
  %173 = vmatprep.subr.mxu0 0.0
  %174 = vmatpush1.msra.mxu0 0.0
  %175 = vmatprep.subr.mxu0 0.0
  %176 = vmatpush1.msra.mxu0 0.0
  %177 = vmatprep.subr.mxu0 0.0
  %178 = vmatpush1.msra.mxu0 0.0
  %179 = vmatprep.subr.mxu0 0.0
  %180 = vmatpush1.msra.mxu0 0.0
  %181 = vmatprep.subr.mxu0 0.0
  %182 = vmatpush1.msra.mxu0 0.0
  %183 = vmatprep.subr.mxu0 0.0
  %184 = vmatpush1.msra.mxu0 0.0
  %185 = vmatprep.subr.mxu0 0.0
  %186 = vmatpush1.msra.mxu0 0.0
  %187 = vmatprep.subr.mxu0 0.0
  %188 = vmatpush1.msra.mxu0 0.0
  %189 = vmatprep.subr.mxu0 0.0
  %190 = vmatpush1.msra.mxu0 0.0
  %191 = vmatprep.subr.mxu0 0.0
  %192 = vmatpush1.msra.mxu0 0.0
  %193 = vmatprep.subr.mxu0 0.0
  %194 = vmatpush1.msra.mxu0 0.0
  %195 = vmatprep.subr.mxu0 0.0
  %196 = vmatpush1.msra.mxu0 0.0
  %197 = vmatprep.subr.mxu0 0.0
  %198 = vmatpush1.msra.mxu0 0.0
  %199 = vmatprep.subr.mxu0 0.0
  %200 = vmatpush1.msra.mxu0 0.0
  %201 = vmatprep.subr.mxu0 0.0
  %202 = vmatpush1.msra.mxu0 0.0
  %203 = vmatprep.subr.mxu0 0.0
  %204 = vmatpush1.msra.mxu0 0.0
  %205 = vmatprep.subr.mxu0 0.0
  %206 = vmatpush1.msra.mxu0 0.0
  %207 = vmatprep.subr.mxu0 0.0
  %208 = vmatpush1.msra.mxu0 0.0
  %209 = vmatprep.subr.mxu0 0.0
  %210 = vmatpush1.msra.mxu0 0.0
  %211 = vmatprep.subr.mxu0 0.0
  %212 = vmatpush1.msra.mxu0 0.0
  %213 = vmatprep.subr.mxu0 0.0
  %214 = vmatpush1.msra.mxu0 0.0
  %215 = vmatprep.subr.mxu0 0.0
  %216 = vmatpush1.msra.mxu0 0.0
  %217 = vmatprep.subr.mxu0 0.0
  %218 = vmatpush1.msra.mxu0 0.0
  %219 = vmatprep.mubr.f32.mxu0 0.0
  %220 = vmatmul.mubr.f32.gmra.mrb[0].mxu0 %v147
  %v221 = vpop.f32.mrb[0].mxu0
  %v222 = vadd.f32 %v138, %v221
  %v223 = vpop.f32.mrb[0].mxu0
  %224 = vmatprep.mubr.f32.mxu0 0.0
  %225 = vmatmul.mubr.f32.gmra.mrb[0].mxu0 %v150
  %v226 = vpop.f32.mrb[0].mxu0
  %v227 = vadd.f32 %v143, %v226
  %v228 = vpop.f32.mrb[0].mxu0
  %229 = vdwg.mxu0
  %v230 = vmax.f32 %v222, 0.0
  %v231 = vmax.f32 %v227, 0.0
  %v232 = vld [vmem:[%s5] sm:$0x1]
  %v233 = vld [vmem:[#allocation2] sm:$0x1]
  %235 = vset.pattern.permute.xlu0 0
  %236 = vperm.xlu0 %235, %v233
  %v237 = vpop.permute.xlu0 %236
  %v239 = vlaneseq
  %v240 = vshrl.u32 %v239, 7
  %v241 = vsub.s32 0, %v240
  %v242 = vrot.slane %v237, %v241
  %v244 = vsel %vm145, %v232, 0
  %v247 = vsel %vm50, %v231, 0
  %249 = vmatprep.subr.mxu0 0.0
  %250 = vmatpush1.msra.mxu0 %v230
  %251 = vmatprep.subr.mxu0 0.0
  %252 = vmatpush1.msra.mxu0 %v247
  %253 = vmatprep.subr.mxu0 0.0
  %254 = vmatpush1.msra.mxu0 0.0
  %255 = vmatprep.subr.mxu0 0.0
  %256 = vmatpush1.msra.mxu0 0.0
  %257 = vmatprep.subr.mxu0 0.0
  %258 = vmatpush1.msra.mxu0 0.0
  %259 = vmatprep.subr.mxu0 0.0
  %260 = vmatpush1.msra.mxu0 0.0
  %261 = vmatprep.subr.mxu0 0.0
  %262 = vmatpush1.msra.mxu0 0.0
  %263 = vmatprep.subr.mxu0 0.0
  %264 = vmatpush1.msra.mxu0 0.0
  %265 = vmatprep.subr.mxu0 0.0
  %266 = vmatpush1.msra.mxu0 0.0
  %267 = vmatprep.subr.mxu0 0.0
  %268 = vmatpush1.msra.mxu0 0.0
  %269 = vmatprep.subr.mxu0 0.0
  %270 = vmatpush1.msra.mxu0 0.0
  %271 = vmatprep.subr.mxu0 0.0
  %272 = vmatpush1.msra.mxu0 0.0
  %273 = vmatprep.subr.mxu0 0.0
  %274 = vmatpush1.msra.mxu0 0.0
  %275 = vmatprep.subr.mxu0 0.0
  %276 = vmatpush1.msra.mxu0 0.0
  %277 = vmatprep.subr.mxu0 0.0
  %278 = vmatpush1.msra.mxu0 0.0
  %279 = vmatprep.subr.mxu0 0.0
  %280 = vmatpush1.msra.mxu0 0.0
  %281 = vmatprep.subr.mxu0 0.0
  %282 = vmatpush1.msra.mxu0 0.0
  %283 = vmatprep.subr.mxu0 0.0
  %284 = vmatpush1.msra.mxu0 0.0
  %285 = vmatprep.subr.mxu0 0.0
  %286 = vmatpush1.msra.mxu0 0.0
  %287 = vmatprep.subr.mxu0 0.0
  %288 = vmatpush1.msra.mxu0 0.0
  %289 = vmatprep.subr.mxu0 0.0
  %290 = vmatpush1.msra.mxu0 0.0
  %291 = vmatprep.subr.mxu0 0.0
  %292 = vmatpush1.msra.mxu0 0.0
  %293 = vmatprep.subr.mxu0 0.0
  %294 = vmatpush1.msra.mxu0 0.0
  %295 = vmatprep.subr.mxu0 0.0
  %296 = vmatpush1.msra.mxu0 0.0
  %297 = vmatprep.subr.mxu0 0.0
  %298 = vmatpush1.msra.mxu0 0.0
  %299 = vmatprep.subr.mxu0 0.0
  %300 = vmatpush1.msra.mxu0 0.0
  %301 = vmatprep.subr.mxu0 0.0
  %302 = vmatpush1.msra.mxu0 0.0
  %303 = vmatprep.subr.mxu0 0.0
  %304 = vmatpush1.msra.mxu0 0.0
  %305 = vmatprep.subr.mxu0 0.0
  %306 = vmatpush1.msra.mxu0 0.0
  %307 = vmatprep.subr.mxu0 0.0
  %308 = vmatpush1.msra.mxu0 0.0
  %309 = vmatprep.subr.mxu0 0.0
  %310 = vmatpush1.msra.mxu0 0.0
  %311 = vmatprep.subr.mxu0 0.0
  %312 = vmatpush1.msra.mxu0 0.0
  %313 = vmatprep.mubr.f32.mxu0 0.0
  %314 = vmatmul.mubr.f32.gmra.mrb[0].mxu0 %v244
  %v315 = vpop.f32.mrb[0].mxu0
  %v316 = vadd.f32 %v242, %v315
  %v317 = vpop.f32.mrb[0].mxu0
  %318 = vdwg.mxu0
  %v319 = vsub.f32 0.0, %v316
  %v320 = vmul.f32 %v319, 1.442695
  %v321 = vpow.pop %v320
  %v322 = vadd.f32 %v321, 1.0
  %v323 = vrcp.pop %v322
  %324 = vst [vmem:[%s7] sm:$0x1] %v323
  // Predicated region
  $region30: #{mlp_forward.1} parent=0 // pred_check
    _
  $region31: #{mlp_forward.1} parent=0 // pred_check_branch
    %326 = sbr.rel (0) target = $region33
  $region32: #{mlp_forward.1} parent=0 // pred_region
    _
  $region33: #{mlp_forward.1} parent=0 // pred_fallthru
    _
  // Predicated region
  $region34: #{mlp_forward.1} parent=0 // pred_check
    _
  $region35: #{mlp_forward.1} parent=0 // pred_check_branch
    %328 = sbr.rel (0) target = $region37
  $region36: #{mlp_forward.1} parent=0 // pred_region
    _
  $region37: #{mlp_forward.1} parent=0 // pred_fallthru
    _

</llo_original>
